<compile_context>
chip_gen: v5e
topology: v5e:2x2
jax: 0.10.0
libtpu: 0.0.40
codegen_flags: <defaults>
</compile_context>

<pallas_src>
import functools

import jax
import jax.numpy as jnp
from jax.experimental import pallas as pl
from jax.experimental.pallas import tpu as pltpu


def _highway_kernel(n_layers, size, compute_dtype, gate_dtype,
                    x_ref, wf_ref, bf_ref, o_ref):
    """One grid step: a (1, C, TL) slab of x through all highway layers.

    x_ref : (1, C, TL)   input slab (channels on sublanes, length on lanes)
    wf_ref: (n, 2C, C)   fused [gate; linear] weights (compute_dtype)
    bf_ref: (n, 2C, 1)   fused [gate; linear] biases (float32)
    o_ref : (1, C, TL)   output slab
    """
    x = x_ref[0, :, :].astype(jnp.float32)                        # (C, TL)
    # n_layers is small and static -> unrolled Python loop (layers are serial).
    for i in range(n_layers):
        w = wf_ref[i]                                             # (2C, C)
        b = bf_ref[i].astype(jnp.float32)                         # (2C, 1)
        # Single fused MXU matmul per layer: (2C, C) @ (C, TL) -> (2C, TL).
        z = jnp.dot(w, x.astype(compute_dtype),
                    preferred_element_type=jnp.float32) + b
        # sigmoid(z) == 0.5 * tanh(0.5 * z) + 0.5 : one EUP transcendental
        # (no exp + divide).  tanh runs in gate_dtype (bf16 -> 2x EUP v6e/v7x).
        zg = (0.5 * z[:size, :]).astype(gate_dtype)               # rows 0:C
        gate = 0.5 * jnp.tanh(zg).astype(jnp.float32) + 0.5
        nonlinear = z[size:, :]                                   # rows C:2C
        # TODO(synk): F.dropout(p=0.1) is identity in eval mode; training-mode
        # dropout (pltpu.prng_random_bits mask) is not implemented here.
        x = x + gate * (nonlinear - x)                            # highway combine
    o_ref[0, :, :] = x.astype(o_ref.dtype)


def _pick_tile_l(L, requested, N):
    """Pick a length tile that is a multiple of 128 or the full L (no padding)."""
    req = max(128, (int(requested) // 128) * 128)
    if L <= req:
        tl = L                       # one full-extent block along length: legal
    else:
        # Largest multiple of 128 <= req that divides L exactly (no ragged tail).
        tl = 0
        d = (min(req, L) // 128) * 128
        while d >= 128:
            if L % d == 0:
                tl = d
                break
            d -= 128
        if tl == 0:
            # No 128-multiple divisor: use req and let Pallas mask the partial
            # last block (avoids host-side pad + slice HBM passes).
            tl = req
    # v7x has 2 TensorCores sharded over the "parallel" grid axes: make sure a
    # single-sample call still produces >= 2 grid steps when the length allows.
    if N == 1 and tl == L and L >= 256:
        tl = (L // 2 // 128) * 128
    return tl


def highway_forward(x_ncl, w_lin, b_lin, w_gate, b_gate, *, tile_l=1024,
                    compute_dtype=jnp.bfloat16, gate_dtype=None):
    """Eval-mode Highway forward.

    x_ncl : (N, C, L), PyTorch Conv1d NCL layout.  Output has the same dtype as
            x_ncl -- pass bf16 activations to halve HBM read+write traffic; the
            in-kernel accumulation / highway combine stay in float32.
    w_lin / w_gate : (n, C, C)  Conv1d weights with the kernel dim squeezed.
    b_lin / b_gate : (n, C)
    tile_l : requested max length positions per grid step (rounded down to a
             multiple of 128 internally, so callers cannot violate (8,128)).
    compute_dtype : matmul-input dtype (bf16 recommended on v6e/v7x).
    gate_dtype : dtype of the gate tanh (defaults to compute_dtype; use
             float32 on v5e, which has no bf16 EUP/VPU).
    """
    n_layers, c_out, c_in = w_lin.shape
    assert c_out == c_in, "Highway layers are square (size -> size)"
    C = c_in
    N, Cx, L = x_ncl.shape
    assert Cx == C
    if gate_dtype is None:
        gate_dtype = compute_dtype

    # Fuse gate + linear into one (2C, C) weight and (2C, 1) bias per layer.
    # Rows [0:C] = gate, rows [C:2C] = linear.  (Tiny glue, not the hot path.)
    w_fused = jnp.concatenate([w_gate, w_lin], axis=1).astype(compute_dtype)
    b_fused = jnp.concatenate([b_gate, b_lin], axis=1).astype(jnp.float32)
    b_fused = b_fused.reshape(n_layers, 2 * C, 1)

    # TODO(synk): for tiny L (< 128 lanes, e.g. unit tests) stores are masked /
    # lane-sparse; folding N into the lane axis would need a layout transpose
    # (an extra HBM pass) and is not worth it at production L.
    tl = _pick_tile_l(L, tile_l, N)
    n_l_tiles = pl.cdiv(L, tl)
    grid = (N, n_l_tiles)

    kernel = functools.partial(_highway_kernel, n_layers, C, compute_dtype,
                               gate_dtype)

    return pl.pallas_call(
        kernel,
        out_shape=jax.ShapeDtypeStruct((N, C, L), x_ncl.dtype),
        grid_spec=pltpu.PrefetchScalarGridSpec(
            num_scalar_prefetch=0,
            grid=grid,
            in_specs=[
                pl.BlockSpec((1, C, tl), lambda b, l: (b, 0, l)),          # x slab
                # Constant index_map -> fetched once, held resident across the
                # grid (double-buffered footprint is tens of KiB at C=64).
                pl.BlockSpec((n_layers, 2 * C, C), lambda b, l: (0, 0, 0)),  # W
                pl.BlockSpec((n_layers, 2 * C, 1), lambda b, l: (0, 0, 0)),  # b
            ],
            out_specs=pl.BlockSpec((1, C, tl), lambda b, l: (b, 0, l)),
        ),
        # Default scoped VMEM is ample up to tile_l=2048; set vmem_limit_bytes
        # explicitly only if pushing tile_l >= 4096.
        compiler_params=pltpu.CompilerParams(
            dimension_semantics=("parallel", "parallel")),
    )(x_ncl, w_fused, b_fused)


def highway_reference(x_ncl, w_lin, b_lin, w_gate, b_gate):
    """Pure-JAX reference matching the PyTorch forward (eval mode)."""
    x = x_ncl
    n_layers = w_lin.shape[0]
    for i in range(n_layers):
        # Conv1d kernel_size=1: y[n, o, l] = sum_c W[o, c] * x[n, c, l] + b[o]
        gate = jax.nn.sigmoid(
            jnp.einsum("oc,ncl->nol", w_gate[i], x) + b_gate[i][None, :, None])
        nonlinear = jnp.einsum("oc,ncl->nol", w_lin[i], x) + b_lin[i][None, :, None]
        x = gate * nonlinear + (1.0 - gate) * x
    return x


if __name__ == "__main__":
    # Highway(layer_num=2, size=64); input (batch=2, channels=64, length=16).
    n_layers = 2
    C = 64
    N, L = 2, 16

    key = jax.random.PRNGKey(0)
    kx, kwl, kbl, kwg, kbg = jax.random.split(key, 5)

    x = jax.random.normal(kx, (N, C, L), dtype=jnp.float32)

    # Deterministic synthetic init:
    #   weights ~ xavier_normal (std = sqrt(2 / (fan_in + fan_out)))
    #   biases  ~ uniform(-1/sqrt(C), 1/sqrt(C)) (Conv1d default).
    xavier_std = (2.0 / (C + C)) ** 0.5
    w_lin = jax.random.normal(kwl, (n_layers, C, C), dtype=jnp.float32) * xavier_std
    w_gate = jax.random.normal(kwg, (n_layers, C, C), dtype=jnp.float32) * xavier_std
    bound = 1.0 / (C ** 0.5)
    b_lin = jax.random.uniform(kbl, (n_layers, C), minval=-bound, maxval=bound,
                               dtype=jnp.float32)
    b_gate = jax.random.uniform(kbg, (n_layers, C), minval=-bound, maxval=bound,
                                dtype=jnp.float32)

    ref = highway_reference(x, w_lin, b_lin, w_gate, b_gate)

    # f32 activations + f32 compute path: tight check against the reference.
    out_f32 = highway_forward(x, w_lin, b_lin, w_gate, b_gate,
                              compute_dtype=jnp.float32)
    out_f32 = jax.block_until_ready(out_f32)
    assert out_f32.shape == (N, C, L)
    assert out_f32.dtype == x.dtype
    assert jnp.allclose(out_f32, ref, atol=2e-4, rtol=2e-4), "f32 mismatch vs reference"

    # bf16 activation I/O + bf16 matmul/gate path (recommended on v6e/v7x):
    # halves HBM traffic; looser tolerance due to bf16 rounding end-to-end.
    x_bf16 = x.astype(jnp.bfloat16)
    out_bf16 = highway_forward(x_bf16, w_lin, b_lin, w_gate, b_gate)
    out_bf16 = jax.block_until_ready(out_bf16)
    assert out_bf16.shape == (N, C, L)
    assert out_bf16.dtype == jnp.bfloat16
    assert jnp.allclose(out_bf16.astype(jnp.float32), ref, atol=0.1, rtol=0.1), \
        "bf16 mismatch vs reference"

    print("KERNEL_OK")
</pallas_src>

<mosaic_0001>
module attributes {stable_mosaic.version = 11 : i64} {
  func.func @_highway_kernel(%arg0: i32, %arg1: i32, %arg2: memref<1x64x16xf32, #tpu.memory_space<vmem>>, %arg3: memref<2x128x64xf32, #tpu.memory_space<vmem>>, %arg4: memref<2x128x1xf32, #tpu.memory_space<vmem>>, %arg5: memref<1x64x16xf32, #tpu.memory_space<vmem>>) attributes {dimension_semantics = [#tpu.dimension_semantics<parallel>, #tpu.dimension_semantics<parallel>], iteration_bounds = array<i64: 2, 1>, scalar_prefetch = 0 : i64, scratch_operands = 0 : i64, tpu.core_type = #tpu.core_type<tc>, window_params = [{transform_indices = @transform_0, window_bounds = array<i64: 1, 64, 16>}, {pipeline_mode = #tpu.pipeline_mode<synchronous>, transform_indices = @transform_1, window_bounds = array<i64: 2, 128, 64>}, {pipeline_mode = #tpu.pipeline_mode<synchronous>, transform_indices = @transform_2, window_bounds = array<i64: 2, 128, 1>}, {transform_indices = @transform_3, window_bounds = array<i64: 1, 64, 16>}]} {
    %c0 = arith.constant 0 : index
    %c0_0 = arith.constant 0 : index
    %c0_1 = arith.constant 0 : index
    %0 = vector.load %arg2[%c0, %c0_0, %c0_1] : memref<1x64x16xf32, #tpu.memory_space<vmem>>, vector<1x64x16xf32>
    %1 = vector.shape_cast %0 : vector<1x64x16xf32> to vector<64x16xf32>
    %c0_2 = arith.constant 0 : index
    %c0_3 = arith.constant 0 : index
    %c0_4 = arith.constant 0 : index
    %2 = vector.load %arg3[%c0_2, %c0_3, %c0_4] : memref<2x128x64xf32, #tpu.memory_space<vmem>>, vector<1x128x64xf32>
    %3 = vector.shape_cast %2 : vector<1x128x64xf32> to vector<128x64xf32>
    %c0_5 = arith.constant 0 : index
    %c0_6 = arith.constant 0 : index
    %c0_7 = arith.constant 0 : index
    %4 = vector.load %arg4[%c0_5, %c0_6, %c0_7] : memref<2x128x1xf32, #tpu.memory_space<vmem>>, vector<1x128x1xf32>
    %5 = vector.shape_cast %4 : vector<1x128x1xf32> to vector<128x1xf32>
    %cst = arith.constant dense<0.000000e+00> : vector<128x16xf32>
    %6 = tpu.matmul %3, %1, %cst {dimension_numbers = #tpu.dot_dimension_numbers<[1], [0], [0], [1], [0, 0, 1, 1], [], []>} : vector<128x64xf32>, vector<64x16xf32>, vector<128x16xf32> -> vector<128x16xf32>
    %7 = vector.broadcast %5 : vector<128x1xf32> to vector<128x16xf32>
    %8 = arith.addf %6, %7 : vector<128x16xf32>
    %9 = vector.extract_strided_slice %8 {offsets = [0, 0], sizes = [64, 16], strides = [1, 1]} : vector<128x16xf32> to vector<64x16xf32>
    %cst_8 = arith.constant 5.000000e-01 : f32
    %10 = vector.broadcast %cst_8 : f32 to vector<64x16xf32>
    %11 = arith.mulf %10, %9 : vector<64x16xf32>
    %12 = math.tanh %11 : vector<64x16xf32>
    %cst_9 = arith.constant 5.000000e-01 : f32
    %13 = vector.broadcast %cst_9 : f32 to vector<64x16xf32>
    %14 = arith.mulf %13, %12 : vector<64x16xf32>
    %cst_10 = arith.constant 5.000000e-01 : f32
    %15 = vector.broadcast %cst_10 : f32 to vector<64x16xf32>
    %16 = arith.addf %14, %15 : vector<64x16xf32>
    %17 = vector.extract_strided_slice %8 {offsets = [64, 0], sizes = [64, 16], strides = [1, 1]} : vector<128x16xf32> to vector<64x16xf32>
    %18 = arith.subf %17, %1 : vector<64x16xf32>
    %19 = arith.mulf %16, %18 : vector<64x16xf32>
    %20 = arith.addf %1, %19 : vector<64x16xf32>
    %c1 = arith.constant 1 : index
    %c0_11 = arith.constant 0 : index
    %c0_12 = arith.constant 0 : index
    %21 = vector.load %arg3[%c1, %c0_11, %c0_12] : memref<2x128x64xf32, #tpu.memory_space<vmem>>, vector<1x128x64xf32>
    %22 = vector.shape_cast %21 : vector<1x128x64xf32> to vector<128x64xf32>
    %c1_13 = arith.constant 1 : index
    %c0_14 = arith.constant 0 : index
    %c0_15 = arith.constant 0 : index
    %23 = vector.load %arg4[%c1_13, %c0_14, %c0_15] : memref<2x128x1xf32, #tpu.memory_space<vmem>>, vector<1x128x1xf32>
    %24 = vector.shape_cast %23 : vector<1x128x1xf32> to vector<128x1xf32>
    %cst_16 = arith.constant dense<0.000000e+00> : vector<128x16xf32>
    %25 = tpu.matmul %22, %20, %cst_16 {dimension_numbers = #tpu.dot_dimension_numbers<[1], [0], [0], [1], [0, 0, 1, 1], [], []>} : vector<128x64xf32>, vector<64x16xf32>, vector<128x16xf32> -> vector<128x16xf32>
    %26 = vector.broadcast %24 : vector<128x1xf32> to vector<128x16xf32>
    %27 = arith.addf %25, %26 : vector<128x16xf32>
    %28 = vector.extract_strided_slice %27 {offsets = [0, 0], sizes = [64, 16], strides = [1, 1]} : vector<128x16xf32> to vector<64x16xf32>
    %cst_17 = arith.constant 5.000000e-01 : f32
    %29 = vector.broadcast %cst_17 : f32 to vector<64x16xf32>
    %30 = arith.mulf %29, %28 : vector<64x16xf32>
    %31 = math.tanh %30 : vector<64x16xf32>
    %cst_18 = arith.constant 5.000000e-01 : f32
    %32 = vector.broadcast %cst_18 : f32 to vector<64x16xf32>
    %33 = arith.mulf %32, %31 : vector<64x16xf32>
    %cst_19 = arith.constant 5.000000e-01 : f32
    %34 = vector.broadcast %cst_19 : f32 to vector<64x16xf32>
    %35 = arith.addf %33, %34 : vector<64x16xf32>
    %36 = vector.extract_strided_slice %27 {offsets = [64, 0], sizes = [64, 16], strides = [1, 1]} : vector<128x16xf32> to vector<64x16xf32>
    %37 = arith.subf %36, %20 : vector<64x16xf32>
    %38 = arith.mulf %35, %37 : vector<64x16xf32>
    %39 = arith.addf %20, %38 : vector<64x16xf32>
    %c0_20 = arith.constant 0 : index
    %c0_21 = arith.constant 0 : index
    %c0_22 = arith.constant 0 : index
    %40 = vector.load %arg5[%c0_20, %c0_21, %c0_22] : memref<1x64x16xf32, #tpu.memory_space<vmem>>, vector<1x64x16xf32>
    %41 = vector.shape_cast %40 : vector<1x64x16xf32> to vector<64x16xf32>
    %42 = vector.shape_cast %39 : vector<64x16xf32> to vector<1x64x16xf32>
    tpu.vector_store %arg5[%c0_20, %c0_21, %c0_22], %42 {strides = array<i32>} : memref<1x64x16xf32, #tpu.memory_space<vmem>>, vector<1x64x16xf32>,
    return
  }
  func.func @transform_0(%arg0: i32, %arg1: i32) -> (i32, i32, i32) {
    %c0_i32 = arith.constant 0 : i32
    %c0_i32_0 = arith.constant 0 : i32
    return %arg0, %c0_i32, %arg1 : i32, i32, i32
  }
  func.func @transform_1(%arg0: i32, %arg1: i32) -> (i32, i32, i32) {
    %c0_i32 = arith.constant 0 : i32
    %c0_i32_0 = arith.constant 0 : i32
    %c0_i32_1 = arith.constant 0 : i32
    %c0_i32_2 = arith.constant 0 : i32
    return %c0_i32, %c0_i32_0, %c0_i32_1 : i32, i32, i32
  }
  func.func @transform_2(%arg0: i32, %arg1: i32) -> (i32, i32, i32) {
    %c0_i32 = arith.constant 0 : i32
    %c0_i32_0 = arith.constant 0 : i32
    %c0_i32_1 = arith.constant 0 : i32
    %c0_i32_2 = arith.constant 0 : i32
    return %c0_i32, %c0_i32_0, %c0_i32_1 : i32, i32, i32
  }
  func.func @transform_3(%arg0: i32, %arg1: i32) -> (i32, i32, i32) {
    %c0_i32 = arith.constant 0 : i32
    %c0_i32_0 = arith.constant 0 : i32
    return %arg0, %c0_i32, %arg1 : i32, i32, i32
  }
}

</mosaic_0001>

<llo_original>
// kernel: tpu_custom_call.1
$region0: #{tpu_custom_call.1}
  #allocation0 [shape = 'u32[]', space=smem, size = 0x4, offset = 0x4, fixed_abs, tag = 'smem constant byte address 0x4 - core index']
  #allocation1 [shape = 'u32[72,128]{1,0:T(1,128)}', space=vmem, size = 0x9000, scoped, tag = 'internal scratch']
  %s0 = inlined_call_operand.vmem [shape: f32[2,64,16], index: 0, kind: input, shape index: {}]
  %s1 = inlined_call_operand.vmem [shape: f32[2,128,64], index: 1, kind: input, shape index: {}]
  %s2 = inlined_call_operand.vmem [shape: f32[2,128,1], index: 2, kind: input, shape index: {}]
  %s3 = inlined_call_operand.vmem [shape: f32[2,64,16], index: 3, kind: output, shape index: {}]
  %s4 = sld [smem:[#allocation0]]
  $region45: #{tpu_custom_call.1} parent=0
    _
  %s6 = ssub.s32 1, %s4
  %s7 = scalar_select 0, %s6, %s4
  loop: start=0, step=1, limit=4
  $region2: #{tpu_custom_call.1} parent=0 // loop_pre_header
    _
  $region3: #{tpu_custom_call.1} parent=0 // loop_header
    %s9 = sphi 0, %s13
    %p10 = scmp.ge.s32.totalorder %s9, 4
    %s16 = sphi 0, %s28
    %s17 = sphi 0, %s24
    %s18 = sphi 0, %s16
    %s19 = sphi 0, %s17
    %s20 = sphi 0, %s18
    %s21 = sphi 0, %s19
    %s33 = sphi 0, %s35
    %s36 = sphi 0, %s33
    %s37 = sphi 0, %s36
    %s53 = sphi 0, %s37
    %s57 = sphi 0, %s57
    %s59 = sphi 0, %s57
    %s60 = sphi 0, %s59
    %s74 = sphi 0, %s60
    %s78 = sphi 0, %s78
    %s80 = sphi 0, %s78
    %s81 = sphi 0, %s80
    %s95 = sphi 0, %s81
    %s103 = sphi 0, %s105
    %s106 = sphi 0, %s103
    %s107 = sphi 0, %s106
    %s123 = sphi 0, %s107
  $region4: #{tpu_custom_call.1} parent=0 // loop_header_branch
    %12 = sbr.rel (%p10) target = $region8
  $region5: #{tpu_custom_call.1} parent=0 // loop_body
    %s14 = ssub.s32 %s9, 1
    %s15 = ssub.s32 %s9, 2
    %s22 = sadd.s32 1, %s17
    %p23 = scmp.ge.s32.totalorder %s22, 1
    %s24 = scalar_select %p23, 0, %s22
    %s25 = sadd.s32 1, %s16
    %s26 = scalar_select %p23, %s25, %s16
    %p27 = scmp.ge.s32.totalorder %s26, 2
    %s28 = scalar_select %p27, 0, %s26
    %s29 = ssub.s32 %s16, %s28
    %s30 = ssub.s32 %s17, %s24
    %s31 = sor.u32 %s29, %s30
    %p32 = scmp.eq.s32.totalorder %s31, 0
    %s34 = sadd.s32 %s33, 1
    %s35 = scalar_select %p32, %s33, %s34
    %p38 = pneg %p32
    %p39 = scmp.eq.s32.totalorder %s9, 1
    %p40 = por %p38, %p39
    %p41 = scmp.ne.s32.totalorder %s33, %s36
    %p42 = scmp.eq.s32.totalorder %s9, 0
    %p43 = por %p41, %p42
    %p44 = scmp.ne.s32.totalorder %s33, %s36
    %p45 = scmp.eq.s32.totalorder %s14, 1
    %p46 = por %p44, %p45
    %p47 = scmp.ne.s32.totalorder %s36, %s37
    %p48 = scmp.eq.s32.totalorder %s14, 0
    %p49 = por %p47, %p48
    %p50 = scmp.ne.s32.totalorder %s36, %s37
    %p51 = scmp.eq.s32.totalorder %s15, 1
    %p52 = por %p50, %p51
    %p54 = scmp.ne.s32.totalorder %s37, %s53
    %p55 = scmp.eq.s32.totalorder %s15, 0
    %p56 = por %p54, %p55
    %s58 = sadd.s32 %s57, 1
    %p61 = scmp.eq.s32.totalorder %s9, 1
    %p62 = scmp.ne.s32.totalorder %s57, %s59
    %p63 = scmp.eq.s32.totalorder %s9, 0
    %p64 = por %p62, %p63
    %p65 = scmp.ne.s32.totalorder %s57, %s59
    %p66 = scmp.eq.s32.totalorder %s14, 1
    %p67 = por %p65, %p66
    %p68 = scmp.ne.s32.totalorder %s59, %s60
    %p69 = scmp.eq.s32.totalorder %s14, 0
    %p70 = por %p68, %p69
    %p71 = scmp.ne.s32.totalorder %s59, %s60
    %p72 = scmp.eq.s32.totalorder %s15, 1
    %p73 = por %p71, %p72
    %p75 = scmp.ne.s32.totalorder %s60, %s74
    %p76 = scmp.eq.s32.totalorder %s15, 0
    %p77 = por %p75, %p76
    %s79 = sadd.s32 %s78, 1
    %p82 = scmp.eq.s32.totalorder %s9, 1
    %p83 = scmp.ne.s32.totalorder %s78, %s80
    %p84 = scmp.eq.s32.totalorder %s9, 0
    %p85 = por %p83, %p84
    %p86 = scmp.ne.s32.totalorder %s78, %s80
    %p87 = scmp.eq.s32.totalorder %s14, 1
    %p88 = por %p86, %p87
    %p89 = scmp.ne.s32.totalorder %s80, %s81
    %p90 = scmp.eq.s32.totalorder %s14, 0
    %p91 = por %p89, %p90
    %p92 = scmp.ne.s32.totalorder %s80, %s81
    %p93 = scmp.eq.s32.totalorder %s15, 1
    %p94 = por %p92, %p93
    %p96 = scmp.ne.s32.totalorder %s81, %s95
    %p97 = scmp.eq.s32.totalorder %s15, 0
    %p98 = por %p96, %p97
    %s99 = ssub.s32 %s16, %s28
    %s100 = ssub.s32 %s17, %s24
    %s101 = sor.u32 %s99, %s100
    %p102 = scmp.eq.s32.totalorder %s101, 0
    %s104 = sadd.s32 %s103, 1
    %s105 = scalar_select %p102, %s103, %s104
    %p108 = pneg %p102
    %p109 = scmp.eq.s32.totalorder %s9, 1
    %p110 = por %p108, %p109
    %p111 = scmp.ne.s32.totalorder %s103, %s106
    %p112 = scmp.eq.s32.totalorder %s9, 0
    %p113 = por %p111, %p112
    %p114 = scmp.ne.s32.totalorder %s103, %s106
    %p115 = scmp.eq.s32.totalorder %s14, 1
    %p116 = por %p114, %p115
    %p117 = scmp.ne.s32.totalorder %s106, %s107
    %p118 = scmp.eq.s32.totalorder %s14, 0
    %p119 = por %p117, %p118
    %p120 = scmp.ne.s32.totalorder %s106, %s107
    %p121 = scmp.eq.s32.totalorder %s15, 1
    %p122 = por %p120, %p121
    %p124 = scmp.ne.s32.totalorder %s107, %s123
    %p125 = scmp.eq.s32.totalorder %s15, 0
    %p126 = por %p124, %p125
    %p127 = scmp.le.s32.totalorder 1, %s9
    %p128 = scmp.lt.s32.totalorder %s9, 3
    %p129 = pnand %p127, %p128
    %p130 = pneg %p129
    // Predicated region
    $region9: #{tpu_custom_call.1} parent=5 // pred_check
      _
    $region10: #{tpu_custom_call.1} parent=5 // pred_check_branch
      %132 = sbr.rel (%p129) target = $region12
    $region11: #{tpu_custom_call.1} parent=5 // pred_region
      %s133 = ssub.s32 %s9, 1
      // Predicated region
      $region13: #{tpu_custom_call.1} parent=11 // pred_check
        %p134 = pneg %p70
      $region14: #{tpu_custom_call.1} parent=11 // pred_check_branch
        %136 = sbr.rel (%p134) target = $region16
      $region15: #{tpu_custom_call.1} parent=11 // pred_region
        _
      $region16: #{tpu_custom_call.1} parent=11 // pred_fallthru
        _
      // Predicated region
      $region17: #{tpu_custom_call.1} parent=11 // pred_check
        %p137 = pneg %p91
      $region18: #{tpu_custom_call.1} parent=11 // pred_check_branch
        %139 = sbr.rel (%p137) target = $region20
      $region19: #{tpu_custom_call.1} parent=11 // pred_region
        _
      $region20: #{tpu_custom_call.1} parent=11 // pred_fallthru
        _
    $region12: #{tpu_custom_call.1} parent=5 // pred_fallthru
      _
    %p140 = scmp.lt.s32.totalorder %s9, 2
    // Predicated region
    $region21: #{tpu_custom_call.1} parent=5 // pred_check
      %p141 = pneg %p140
    $region22: #{tpu_custom_call.1} parent=5 // pred_check_branch
      %143 = sbr.rel (%p141) target = $region24
    $region23: #{tpu_custom_call.1} parent=5 // pred_region
      // Predicated region
      $region25: #{tpu_custom_call.1} parent=23 // pred_check
        %p144 = pneg %p43
      $region26: #{tpu_custom_call.1} parent=23 // pred_check_branch
        %146 = sbr.rel (%p144) target = $region28
      $region27: #{tpu_custom_call.1} parent=23 // pred_region
        %p147 = scmp.lt.s32.totalorder %s16, 1
        %s148 = scalar_select %p147, %s16, 1
        %p149 = scmp.lt.s32.totalorder %s17, 0
        %s150 = scalar_select %p149, %s17, 0
        %s151 = smul.addr %s148, 8
        %s152 = sadd.s32 %s150, %s151
        %s153 = smul.addr %s152, 8
        %s154 = scalar_lea.vmem %s0, %s153
      $region28: #{tpu_custom_call.1} parent=23 // pred_fallthru
        _
    $region24: #{tpu_custom_call.1} parent=5 // pred_fallthru
      _
    %p155 = scmp.le.s32.totalorder 1, %s9
    %p156 = scmp.lt.s32.totalorder %s9, 3
    %p157 = pnand %p155, %p156
    %p158 = pneg %p157
    // Predicated region
    $region29: #{tpu_custom_call.1} parent=5 // pred_check
      _
    $region30: #{tpu_custom_call.1} parent=5 // pred_check_branch
      %160 = sbr.rel (%p157) target = $region32
    $region31: #{tpu_custom_call.1} parent=5 // pred_region
      %s161 = ssub.s32 %s9, 1
      %p162 = scmp.lt.s32.totalorder %s18, 1
      %s163 = scalar_select %p162, %s18, 1
      %p164 = scmp.lt.s32.totalorder %s19, 0
      %s165 = scalar_select %p164, %s19, 0
      %s166 = smul.addr %s163, 8
      %s167 = sadd.s32 %s165, %s166
      %s168 = smul.addr %s167, 8
      %s169 = scalar_lea.vmem %s0, %s168
      %p170 = pneg %p49
      %p171 = pneg %p46
      %p172 = pneg %p70
      %p173 = pneg %p67
      %p174 = pneg %p91
      %p175 = pneg %p88
      %p176 = pneg %p119
      %p177 = pneg %p116
      %p178 = scmp.lt.s32.totalorder %s18, 1
      %s179 = scalar_select %p178, %s18, 1
      %p180 = scmp.lt.s32.totalorder %s19, 0
      %s181 = scalar_select %p180, %s19, 0
      %s182 = smul.addr %s179, 8
      %s183 = sadd.s32 %s181, %s182
      %s184 = smul.addr %s183, 8
      %s185 = scalar_lea.vmem %s3, %s184
      %p186 = scmp.lt.s32.totalorder %s18, 1
      %s187 = scalar_select %p186, %s18, 1
      %p188 = scmp.lt.s32.totalorder %s19, 0
      %s189 = scalar_select %p188, %s19, 0
      %s190 = smul.addr %s187, 8
      %s191 = sadd.s32 %s189, %s190
      %s192 = smul.addr %s191, 8
      %s193 = scalar_lea.vmem %s0, %s192
      %p194 = scmp.lt.s32.totalorder %s18, 1
      %s195 = scalar_select %p194, %s18, 1
      %p196 = scmp.lt.s32.totalorder %s19, 0
      %s197 = scalar_select %p196, %s19, 0
      %s198 = smul.addr %s195, 8
      %s199 = sadd.s32 %s197, %s198
      %s200 = smul.addr %s199, 8
      %s201 = scalar_lea.vmem %s3, %s200
      %v202 = vld [vmem:[%s193] sm:$0xff]
      %v203 = vld [vmem:[%s193 + $0x8] sm:$0xff]
      %v204 = vld [vmem:[%s193 + $0x10] sm:$0xff]
      %v205 = vld [vmem:[%s193 + $0x18] sm:$0xff]
      %v206 = vld [vmem:[%s193 + $0x20] sm:$0xff]
      %v207 = vld [vmem:[%s193 + $0x28] sm:$0xff]
      %v208 = vld [vmem:[%s193 + $0x30] sm:$0xff]
      %v209 = vld [vmem:[%s193 + $0x38] sm:$0xff]
      %v210 = vld [vmem:[%s1] sm:$0xff]
      %v211 = vld [vmem:[%s1 + $0x8] sm:$0xff]
      %v212 = vld [vmem:[%s1 + $0x10] sm:$0xff]
      %v213 = vld [vmem:[%s1 + $0x18] sm:$0xff]
      %v214 = vld [vmem:[%s1 + $0x20] sm:$0xff]
      %v215 = vld [vmem:[%s1 + $0x28] sm:$0xff]
      %v216 = vld [vmem:[%s1 + $0x30] sm:$0xff]
      %v217 = vld [vmem:[%s1 + $0x38] sm:$0xff]
      %v218 = vld [vmem:[%s1 + $0x40] sm:$0xff]
      %v219 = vld [vmem:[%s1 + $0x48] sm:$0xff]
      %v220 = vld [vmem:[%s1 + $0x50] sm:$0xff]
      %v221 = vld [vmem:[%s1 + $0x58] sm:$0xff]
      %v222 = vld [vmem:[%s1 + $0x60] sm:$0xff]
      %v223 = vld [vmem:[%s1 + $0x68] sm:$0xff]
      %v224 = vld [vmem:[%s1 + $0x70] sm:$0xff]
      %v225 = vld [vmem:[%s1 + $0x78] sm:$0xff]
      %v226 = vld [vmem:[%s2] sm:$0xff]
      %v227 = vld [vmem:[%s2 + $0x8] sm:$0xff]
      %v228 = vld [vmem:[%s2 + $0x10] sm:$0xff]
      %v229 = vld [vmem:[%s2 + $0x18] sm:$0xff]
      %v230 = vld [vmem:[%s2 + $0x20] sm:$0xff]
      %v231 = vld [vmem:[%s2 + $0x28] sm:$0xff]
      %v232 = vld [vmem:[%s2 + $0x30] sm:$0xff]
      %v233 = vld [vmem:[%s2 + $0x38] sm:$0xff]
      %v234 = vld [vmem:[%s2 + $0x40] sm:$0xff]
      %v235 = vld [vmem:[%s2 + $0x48] sm:$0xff]
      %v236 = vld [vmem:[%s2 + $0x50] sm:$0xff]
      %v237 = vld [vmem:[%s2 + $0x58] sm:$0xff]
      %v238 = vld [vmem:[%s2 + $0x60] sm:$0xff]
      %v239 = vld [vmem:[%s2 + $0x68] sm:$0xff]
      %v240 = vld [vmem:[%s2 + $0x70] sm:$0xff]
      %v241 = vld [vmem:[%s2 + $0x78] sm:$0xff]
      %243 = vset.pattern.permute.xlu0 0
      %244 = vperm.xlu0 %243, %v226
      %v245 = vpop.permute.xlu0 %244
      %248 = vset.pattern.permute.xlu0 0
      %249 = vperm.xlu0 %248, %v227
      %v250 = vpop.permute.xlu0 %249
      %253 = vset.pattern.permute.xlu0 0
      %254 = vperm.xlu0 %253, %v228
      %v255 = vpop.permute.xlu0 %254
      %258 = vset.pattern.permute.xlu0 0
      %259 = vperm.xlu0 %258, %v229
      %v260 = vpop.permute.xlu0 %259
      %263 = vset.pattern.permute.xlu0 0
      %264 = vperm.xlu0 %263, %v230
      %v265 = vpop.permute.xlu0 %264
      %268 = vset.pattern.permute.xlu0 0
      %269 = vperm.xlu0 %268, %v231
      %v270 = vpop.permute.xlu0 %269
      %273 = vset.pattern.permute.xlu0 0
      %274 = vperm.xlu0 %273, %v232
      %v275 = vpop.permute.xlu0 %274
      %278 = vset.pattern.permute.xlu0 0
      %279 = vperm.xlu0 %278, %v233
      %v280 = vpop.permute.xlu0 %279
      %283 = vset.pattern.permute.xlu0 0
      %284 = vperm.xlu0 %283, %v234
      %v285 = vpop.permute.xlu0 %284
      %288 = vset.pattern.permute.xlu0 0
      %289 = vperm.xlu0 %288, %v235
      %v290 = vpop.permute.xlu0 %289
      %293 = vset.pattern.permute.xlu0 0
      %294 = vperm.xlu0 %293, %v236
      %v295 = vpop.permute.xlu0 %294
      %298 = vset.pattern.permute.xlu0 0
      %299 = vperm.xlu0 %298, %v237
      %v300 = vpop.permute.xlu0 %299
      %303 = vset.pattern.permute.xlu0 0
      %304 = vperm.xlu0 %303, %v238
      %v305 = vpop.permute.xlu0 %304
      %308 = vset.pattern.permute.xlu0 0
      %309 = vperm.xlu0 %308, %v239
      %v310 = vpop.permute.xlu0 %309
      %313 = vset.pattern.permute.xlu0 0
      %314 = vperm.xlu0 %313, %v240
      %v315 = vpop.permute.xlu0 %314
      %318 = vset.pattern.permute.xlu0 0
      %319 = vperm.xlu0 %318, %v241
      %v320 = vpop.permute.xlu0 %319
      %vm322 = vcmask 523264
      %v324 = vsel %vm322, %v210, 0
      %v327 = vsel %vm322, %v211, 0
      %v330 = vsel %vm322, %v212, 0
      %v333 = vsel %vm322, %v213, 0
      %v336 = vsel %vm322, %v214, 0
      %v339 = vsel %vm322, %v215, 0
      %v342 = vsel %vm322, %v216, 0
      %v345 = vsel %vm322, %v217, 0
      %v348 = vsel %vm322, %v218, 0
      %v351 = vsel %vm322, %v219, 0
      %v354 = vsel %vm322, %v220, 0
      %v357 = vsel %vm322, %v221, 0
      %v360 = vsel %vm322, %v222, 0
      %v363 = vsel %vm322, %v223, 0
      %v366 = vsel %vm322, %v224, 0
      %v369 = vsel %vm322, %v225, 0
      %371 = vmatpush.msra.mxu0 0.0
      %372 = vmatpush.msra.mxu0 0.0
      %373 = vmatpush.msra.mxu0 0.0
      %374 = vmatpush.msra.mxu0 0.0
      %375 = vmatpush.msra.mxu0 0.0
      %376 = vmatpush.msra.mxu0 0.0
      %377 = vmatpush.msra.mxu0 0.0
      %378 = vmatpush.msra.mxu0 0.0
      %379 = vmatpush.msra.mxu0 %v209
      %380 = vmatpush.msra.mxu0 %v208
      %381 = vmatpush.msra.mxu0 %v207
      %382 = vmatpush.msra.mxu0 %v206
      %383 = vmatpush.msra.mxu0 %v205
      %384 = vmatpush.msra.mxu0 %v204
      %385 = vmatpush.msra.mxu0 %v203
      %386 = vmatpush.msra.mxu0 %v202
      %387 = vmatmul.f32.gmra.mxu0 %v324
      %v388 = vpop.f32.mrf.mxu0
      %v389 = vadd.f32 %v245, %v388
      %390 = vmatmul.f32.gmra.mxu0 %v327
      %v391 = vpop.f32.mrf.mxu0
      %v392 = vadd.f32 %v250, %v391
      %393 = vmatmul.f32.gmra.mxu0 %v330
      %v394 = vpop.f32.mrf.mxu0
      %v395 = vadd.f32 %v255, %v394
      %396 = vmatmul.f32.gmra.mxu0 %v333
      %v397 = vpop.f32.mrf.mxu0
      %v398 = vadd.f32 %v260, %v397
      %399 = vmatmul.f32.gmra.mxu0 %v336
      %v400 = vpop.f32.mrf.mxu0
      %v401 = vadd.f32 %v265, %v400
      %402 = vmatmul.f32.gmra.mxu0 %v339
      %v403 = vpop.f32.mrf.mxu0
      %v404 = vadd.f32 %v270, %v403
      %405 = vmatmul.f32.gmra.mxu0 %v342
      %v406 = vpop.f32.mrf.mxu0
      %v407 = vadd.f32 %v275, %v406
      %408 = vmatmul.f32.gmra.mxu0 %v345
      %v409 = vpop.f32.mrf.mxu0
      %v410 = vadd.f32 %v280, %v409
      %411 = vmatmul.f32.gmra.mxu0 %v348
      %v412 = vpop.f32.mrf.mxu0
      %v413 = vadd.f32 %v285, %v412
      %414 = vmatmul.f32.gmra.mxu0 %v351
      %v415 = vpop.f32.mrf.mxu0
      %v416 = vadd.f32 %v290, %v415
      %417 = vmatmul.f32.gmra.mxu0 %v354
      %v418 = vpop.f32.mrf.mxu0
      %v419 = vadd.f32 %v295, %v418
      %420 = vmatmul.f32.gmra.mxu0 %v357
      %v421 = vpop.f32.mrf.mxu0
      %v422 = vadd.f32 %v300, %v421
      %423 = vmatmul.f32.gmra.mxu0 %v360
      %v424 = vpop.f32.mrf.mxu0
      %v425 = vadd.f32 %v305, %v424
      %426 = vmatmul.f32.gmra.mxu0 %v363
      %v427 = vpop.f32.mrf.mxu0
      %v428 = vadd.f32 %v310, %v427
      %429 = vmatmul.f32.gmra.mxu0 %v366
      %v430 = vpop.f32.mrf.mxu0
      %v431 = vadd.f32 %v315, %v430
      %432 = vmatmul.f32.gmra.mxu0 %v369
      %v433 = vpop.f32.mrf.mxu0
      %v434 = vadd.f32 %v320, %v433
      %435 = vdwg.mxu0
      %v436 = vmul.f32 %v389, 0.5
      %v437 = vmul.f32 %v392, 0.5
      %v438 = vmul.f32 %v395, 0.5
      %v439 = vmul.f32 %v398, 0.5
      %v440 = vmul.f32 %v401, 0.5
      %v441 = vmul.f32 %v404, 0.5
      %v442 = vmul.f32 %v407, 0.5
      %v443 = vmul.f32 %v410, 0.5
      %v444 = vtanh.pop %v436
      %v445 = vtanh.pop %v437
      %v446 = vtanh.pop %v438
      %v447 = vtanh.pop %v439
      %v448 = vtanh.pop %v440
      %v449 = vtanh.pop %v441
      %v450 = vtanh.pop %v442
      %v451 = vtanh.pop %v443
      %v452 = vmul.f32 %v444, 0.5
      %v453 = vmul.f32 %v445, 0.5
      %v454 = vmul.f32 %v446, 0.5
      %v455 = vmul.f32 %v447, 0.5
      %v456 = vmul.f32 %v448, 0.5
      %v457 = vmul.f32 %v449, 0.5
      %v458 = vmul.f32 %v450, 0.5
      %v459 = vmul.f32 %v451, 0.5
      %v460 = vadd.f32 %v452, 0.5
      %v461 = vadd.f32 %v453, 0.5
      %v462 = vadd.f32 %v454, 0.5
      %v463 = vadd.f32 %v455, 0.5
      %v464 = vadd.f32 %v456, 0.5
      %v465 = vadd.f32 %v457, 0.5
      %v466 = vadd.f32 %v458, 0.5
      %v467 = vadd.f32 %v459, 0.5
      %v468 = vsub.f32 %v413, %v202
      %v469 = vsub.f32 %v416, %v203
      %v470 = vsub.f32 %v419, %v204
      %v471 = vsub.f32 %v422, %v205
      %v472 = vsub.f32 %v425, %v206
      %v473 = vsub.f32 %v428, %v207
      %v474 = vsub.f32 %v431, %v208
      %v475 = vsub.f32 %v434, %v209
      %v476 = vmul.f32 %v460, %v468
      %v477 = vmul.f32 %v461, %v469
      %v478 = vmul.f32 %v462, %v470
      %v479 = vmul.f32 %v463, %v471
      %v480 = vmul.f32 %v464, %v472
      %v481 = vmul.f32 %v465, %v473
      %v482 = vmul.f32 %v466, %v474
      %v483 = vmul.f32 %v467, %v475
      %v484 = vadd.f32 %v202, %v476
      %v485 = vadd.f32 %v203, %v477
      %v486 = vadd.f32 %v204, %v478
      %v487 = vadd.f32 %v205, %v479
      %v488 = vadd.f32 %v206, %v480
      %v489 = vadd.f32 %v207, %v481
      %v490 = vadd.f32 %v208, %v482
      %v491 = vadd.f32 %v209, %v483
      %s492 = scalar_lea.vmem %s1, 128
      %v493 = vld [vmem:[%s492] sm:$0xff]
      %v494 = vld [vmem:[%s492 + $0x8] sm:$0xff]
      %v495 = vld [vmem:[%s492 + $0x10] sm:$0xff]
      %v496 = vld [vmem:[%s492 + $0x18] sm:$0xff]
      %v497 = vld [vmem:[%s492 + $0x20] sm:$0xff]
      %v498 = vld [vmem:[%s492 + $0x28] sm:$0xff]
      %v499 = vld [vmem:[%s492 + $0x30] sm:$0xff]
      %v500 = vld [vmem:[%s492 + $0x38] sm:$0xff]
      %v501 = vld [vmem:[%s492 + $0x40] sm:$0xff]
      %v502 = vld [vmem:[%s492 + $0x48] sm:$0xff]
      %v503 = vld [vmem:[%s492 + $0x50] sm:$0xff]
      %v504 = vld [vmem:[%s492 + $0x58] sm:$0xff]
      %v505 = vld [vmem:[%s492 + $0x60] sm:$0xff]
      %v506 = vld [vmem:[%s492 + $0x68] sm:$0xff]
      %v507 = vld [vmem:[%s492 + $0x70] sm:$0xff]
      %v508 = vld [vmem:[%s492 + $0x78] sm:$0xff]
      %s509 = scalar_lea.vmem %s2, 128
      %v510 = vld [vmem:[%s509] sm:$0xff]
      %v511 = vld [vmem:[%s509 + $0x8] sm:$0xff]
      %v512 = vld [vmem:[%s509 + $0x10] sm:$0xff]
      %v513 = vld [vmem:[%s509 + $0x18] sm:$0xff]
      %v514 = vld [vmem:[%s509 + $0x20] sm:$0xff]
      %v515 = vld [vmem:[%s509 + $0x28] sm:$0xff]
      %v516 = vld [vmem:[%s509 + $0x30] sm:$0xff]
      %v517 = vld [vmem:[%s509 + $0x38] sm:$0xff]
      %v518 = vld [vmem:[%s509 + $0x40] sm:$0xff]
      %v519 = vld [vmem:[%s509 + $0x48] sm:$0xff]
      %v520 = vld [vmem:[%s509 + $0x50] sm:$0xff]
      %v521 = vld [vmem:[%s509 + $0x58] sm:$0xff]
      %v522 = vld [vmem:[%s509 + $0x60] sm:$0xff]
      %v523 = vld [vmem:[%s509 + $0x68] sm:$0xff]
      %v524 = vld [vmem:[%s509 + $0x70] sm:$0xff]
      %v525 = vld [vmem:[%s509 + $0x78] sm:$0xff]
      %527 = vset.pattern.permute.xlu0 0
      %528 = vperm.xlu0 %527, %v510
      %v529 = vpop.permute.xlu0 %528
      %532 = vset.pattern.permute.xlu0 0
      %533 = vperm.xlu0 %532, %v511
      %v534 = vpop.permute.xlu0 %533
      %537 = vset.pattern.permute.xlu0 0
      %538 = vperm.xlu0 %537, %v512
      %v539 = vpop.permute.xlu0 %538
      %542 = vset.pattern.permute.xlu0 0
      %543 = vperm.xlu0 %542, %v513
      %v544 = vpop.permute.xlu0 %543
      %547 = vset.pattern.permute.xlu0 0
      %548 = vperm.xlu0 %547, %v514
      %v549 = vpop.permute.xlu0 %548
      %552 = vset.pattern.permute.xlu0 0
      %553 = vperm.xlu0 %552, %v515
      %v554 = vpop.permute.xlu0 %553
      %557 = vset.pattern.permute.xlu0 0
      %558 = vperm.xlu0 %557, %v516
      %v559 = vpop.permute.xlu0 %558
      %562 = vset.pattern.permute.xlu0 0
      %563 = vperm.xlu0 %562, %v517
      %v564 = vpop.permute.xlu0 %563
      %567 = vset.pattern.permute.xlu0 0
      %568 = vperm.xlu0 %567, %v518
      %v569 = vpop.permute.xlu0 %568
      %572 = vset.pattern.permute.xlu0 0
      %573 = vperm.xlu0 %572, %v519
      %v574 = vpop.permute.xlu0 %573
      %577 = vset.pattern.permute.xlu0 0
      %578 = vperm.xlu0 %577, %v520
      %v579 = vpop.permute.xlu0 %578
      %582 = vset.pattern.permute.xlu0 0
      %583 = vperm.xlu0 %582, %v521
      %v584 = vpop.permute.xlu0 %583
      %587 = vset.pattern.permute.xlu0 0
      %588 = vperm.xlu0 %587, %v522
      %v589 = vpop.permute.xlu0 %588
      %592 = vset.pattern.permute.xlu0 0
      %593 = vperm.xlu0 %592, %v523
      %v594 = vpop.permute.xlu0 %593
      %597 = vset.pattern.permute.xlu0 0
      %598 = vperm.xlu0 %597, %v524
      %v599 = vpop.permute.xlu0 %598
      %602 = vset.pattern.permute.xlu0 0
      %603 = vperm.xlu0 %602, %v525
      %v604 = vpop.permute.xlu0 %603
      %v607 = vsel %vm322, %v493, 0
      %v610 = vsel %vm322, %v494, 0
      %v613 = vsel %vm322, %v495, 0
      %v616 = vsel %vm322, %v496, 0
      %v619 = vsel %vm322, %v497, 0
      %v622 = vsel %vm322, %v498, 0
      %v625 = vsel %vm322, %v499, 0
      %v628 = vsel %vm322, %v500, 0
      %v631 = vsel %vm322, %v501, 0
      %v634 = vsel %vm322, %v502, 0
      %v637 = vsel %vm322, %v503, 0
      %v640 = vsel %vm322, %v504, 0
      %v643 = vsel %vm322, %v505, 0
      %v646 = vsel %vm322, %v506, 0
      %v649 = vsel %vm322, %v507, 0
      %v652 = vsel %vm322, %v508, 0
      %654 = vmatpush.msra.mxu0 0.0
      %655 = vmatpush.msra.mxu0 0.0
      %656 = vmatpush.msra.mxu0 0.0
      %657 = vmatpush.msra.mxu0 0.0
      %658 = vmatpush.msra.mxu0 0.0
      %659 = vmatpush.msra.mxu0 0.0
      %660 = vmatpush.msra.mxu0 0.0
      %661 = vmatpush.msra.mxu0 0.0
      %662 = vmatpush.msra.mxu0 %v491
      %663 = vmatpush.msra.mxu0 %v490
      %664 = vmatpush.msra.mxu0 %v489
      %665 = vmatpush.msra.mxu0 %v488
      %666 = vmatpush.msra.mxu0 %v487
      %667 = vmatpush.msra.mxu0 %v486
      %668 = vmatpush.msra.mxu0 %v485
      %669 = vmatpush.msra.mxu0 %v484
      %670 = vmatmul.f32.gmra.mxu0 %v607
      %v671 = vpop.f32.mrf.mxu0
      %v672 = vadd.f32 %v529, %v671
      %673 = vmatmul.f32.gmra.mxu0 %v610
      %v674 = vpop.f32.mrf.mxu0
      %v675 = vadd.f32 %v534, %v674
      %676 = vmatmul.f32.gmra.mxu0 %v613
      %v677 = vpop.f32.mrf.mxu0
      %v678 = vadd.f32 %v539, %v677
      %679 = vmatmul.f32.gmra.mxu0 %v616
      %v680 = vpop.f32.mrf.mxu0
      %v681 = vadd.f32 %v544, %v680
      %682 = vmatmul.f32.gmra.mxu0 %v619
      %v683 = vpop.f32.mrf.mxu0
      %v684 = vadd.f32 %v549, %v683
      %685 = vmatmul.f32.gmra.mxu0 %v622
      %v686 = vpop.f32.mrf.mxu0
      %v687 = vadd.f32 %v554, %v686
      %688 = vmatmul.f32.gmra.mxu0 %v625
      %v689 = vpop.f32.mrf.mxu0
      %v690 = vadd.f32 %v559, %v689
      %691 = vmatmul.f32.gmra.mxu0 %v628
      %v692 = vpop.f32.mrf.mxu0
      %v693 = vadd.f32 %v564, %v692
      %694 = vmatmul.f32.gmra.mxu0 %v631
      %v695 = vpop.f32.mrf.mxu0
      %v696 = vadd.f32 %v569, %v695
      %697 = vmatmul.f32.gmra.mxu0 %v634
      %v698 = vpop.f32.mrf.mxu0
      %v699 = vadd.f32 %v574, %v698
      %700 = vmatmul.f32.gmra.mxu0 %v637
      %v701 = vpop.f32.mrf.mxu0
      %v702 = vadd.f32 %v579, %v701
      %703 = vmatmul.f32.gmra.mxu0 %v640
      %v704 = vpop.f32.mrf.mxu0
      %v705 = vadd.f32 %v584, %v704
      %706 = vmatmul.f32.gmra.mxu0 %v643
      %v707 = vpop.f32.mrf.mxu0
      %v708 = vadd.f32 %v589, %v707
      %709 = vmatmul.f32.gmra.mxu0 %v646
      %v710 = vpop.f32.mrf.mxu0
      %v711 = vadd.f32 %v594, %v710
      %712 = vmatmul.f32.gmra.mxu0 %v649
      %v713 = vpop.f32.mrf.mxu0
      %v714 = vadd.f32 %v599, %v713
      %715 = vmatmul.f32.gmra.mxu0 %v652
      %v716 = vpop.f32.mrf.mxu0
      %v717 = vadd.f32 %v604, %v716
      %718 = vdwg.mxu0
      %v719 = vmul.f32 %v672, 0.5
      %v720 = vmul.f32 %v675, 0.5
      %v721 = vmul.f32 %v678, 0.5
      %v722 = vmul.f32 %v681, 0.5
      %v723 = vmul.f32 %v684, 0.5
      %v724 = vmul.f32 %v687, 0.5
      %v725 = vmul.f32 %v690, 0.5
      %v726 = vmul.f32 %v693, 0.5
      %v727 = vtanh.pop %v719
      %v728 = vtanh.pop %v720
      %v729 = vtanh.pop %v721
      %v730 = vtanh.pop %v722
      %v731 = vtanh.pop %v723
      %v732 = vtanh.pop %v724
      %v733 = vtanh.pop %v725
      %v734 = vtanh.pop %v726
      %v735 = vmul.f32 %v727, 0.5
      %v736 = vmul.f32 %v728, 0.5
      %v737 = vmul.f32 %v729, 0.5
      %v738 = vmul.f32 %v730, 0.5
      %v739 = vmul.f32 %v731, 0.5
      %v740 = vmul.f32 %v732, 0.5
      %v741 = vmul.f32 %v733, 0.5
      %v742 = vmul.f32 %v734, 0.5
      %v743 = vadd.f32 %v735, 0.5
      %v744 = vadd.f32 %v736, 0.5
      %v745 = vadd.f32 %v737, 0.5
      %v746 = vadd.f32 %v738, 0.5
      %v747 = vadd.f32 %v739, 0.5
      %v748 = vadd.f32 %v740, 0.5
      %v749 = vadd.f32 %v741, 0.5
      %v750 = vadd.f32 %v742, 0.5
      %v751 = vsub.f32 %v696, %v484
      %v752 = vsub.f32 %v699, %v485
      %v753 = vsub.f32 %v702, %v486
      %v754 = vsub.f32 %v705, %v487
      %v755 = vsub.f32 %v708, %v488
      %v756 = vsub.f32 %v711, %v489
      %v757 = vsub.f32 %v714, %v490
      %v758 = vsub.f32 %v717, %v491
      %v759 = vmul.f32 %v743, %v751
      %v760 = vmul.f32 %v744, %v752
      %v761 = vmul.f32 %v745, %v753
      %v762 = vmul.f32 %v746, %v754
      %v763 = vmul.f32 %v747, %v755
      %v764 = vmul.f32 %v748, %v756
      %v765 = vmul.f32 %v749, %v757
      %v766 = vmul.f32 %v750, %v758
      %v767 = vadd.f32 %v484, %v759
      %v768 = vadd.f32 %v485, %v760
      %v769 = vadd.f32 %v486, %v761
      %v770 = vadd.f32 %v487, %v762
      %v771 = vadd.f32 %v488, %v763
      %v772 = vadd.f32 %v489, %v764
      %v773 = vadd.f32 %v490, %v765
      %v774 = vadd.f32 %v491, %v766
      %vm775 = vcmask 130048
      %776 = vst.msk [vmem:[%s201] sm:$0xff] %vm775, %v767
      %777 = vst.msk [vmem:[%s201 + $0x8] sm:$0xff] %vm775, %v768
      %778 = vst.msk [vmem:[%s201 + $0x10] sm:$0xff] %vm775, %v769
      %779 = vst.msk [vmem:[%s201 + $0x18] sm:$0xff] %vm775, %v770
      %780 = vst.msk [vmem:[%s201 + $0x20] sm:$0xff] %vm775, %v771
      %781 = vst.msk [vmem:[%s201 + $0x28] sm:$0xff] %vm775, %v772
      %782 = vst.msk [vmem:[%s201 + $0x30] sm:$0xff] %vm775, %v773
      %783 = vst.msk [vmem:[%s201 + $0x38] sm:$0xff] %vm775, %v774
      %p784 = scmp.lt.s32.totalorder %s18, 1
      %s785 = scalar_select %p784, %s18, 1
      %p786 = scmp.lt.s32.totalorder %s19, 0
      %s787 = scalar_select %p786, %s19, 0
      %s788 = smul.addr %s785, 8
      %s789 = sadd.s32 %s787, %s788
      %s790 = smul.addr %s789, 8
      %s791 = scalar_lea.vmem %s3, %s790
      // Predicated region
      $region33: #{tpu_custom_call.1} parent=31 // pred_check
        %p792 = pneg %p116
      $region34: #{tpu_custom_call.1} parent=31 // pred_check_branch
        %794 = sbr.rel (%p792) target = $region36
      $region35: #{tpu_custom_call.1} parent=31 // pred_region
        _
      $region36: #{tpu_custom_call.1} parent=31 // pred_fallthru
        _
    $region32: #{tpu_custom_call.1} parent=5 // pred_fallthru
      _
    %p795 = scmp.le.s32.totalorder 2, %s9
    // Predicated region
    $region37: #{tpu_custom_call.1} parent=5 // pred_check
      %p796 = pneg %p795
    $region38: #{tpu_custom_call.1} parent=5 // pred_check_branch
      %798 = sbr.rel (%p796) target = $region40
    $region39: #{tpu_custom_call.1} parent=5 // pred_region
      %s799 = ssub.s32 %s9, 2
      // Predicated region
      $region41: #{tpu_custom_call.1} parent=39 // pred_check
        %p800 = pneg %p122
      $region42: #{tpu_custom_call.1} parent=39 // pred_check_branch
        %802 = sbr.rel (%p800) target = $region44
      $region43: #{tpu_custom_call.1} parent=39 // pred_region
        %p803 = scmp.lt.s32.totalorder %s20, 1
        %s804 = scalar_select %p803, %s20, 1
        %p805 = scmp.lt.s32.totalorder %s21, 0
        %s806 = scalar_select %p805, %s21, 0
        %s807 = smul.addr %s804, 8
        %s808 = sadd.s32 %s806, %s807
        %s809 = smul.addr %s808, 8
        %s810 = scalar_lea.vmem %s3, %s809
      $region44: #{tpu_custom_call.1} parent=39 // pred_fallthru
        _
    $region40: #{tpu_custom_call.1} parent=5 // pred_fallthru
      _
  $region6: #{tpu_custom_call.1} parent=0 // loop_footer
    %s13 = sadd.s32 1, %s9
  $region7: #{tpu_custom_call.1} parent=0 // loop_footer_branch
    %8 = sbr.rel target = $region3
  $region8: #{tpu_custom_call.1} parent=0 // loop_exit
    _

</llo_original>
